<compile_context>
chip_gen: v6e
topology: v6e:2x2x1
jax: 0.10.0
libtpu: 0.0.40
codegen_flags: <defaults>
</compile_context>

<pallas_src>
import functools

import jax
import jax.numpy as jnp
from jax.experimental import pallas as pl
from jax.experimental.pallas import tpu as pltpu

LANE = 128          # MXU/vreg lane width: weight columns are padded to this
_DEF_TILE_M = 1024  # max batch-tile rows (amortizes ~0.35 us per-step overhead)


def _round_up(v, m):
    return ((v + m - 1) // m) * m


def _pick_tile_m(batch):
    """Batch-tile rows: large tiles, but >=2 grid steps when possible (v7x megacore)."""
    if batch <= 8:
        return 8
    half = _round_up(pl.cdiv(batch, 2), 8)
    return min(_DEF_TILE_M, half)


# ---------------------------------------------------------------------------
# Pallas kernel: fused f32 linear (matmul + bias), narrow (lane-masked) store.
# ---------------------------------------------------------------------------
def _linear_kernel(x_ref, w_ref, b_ref, o_ref):
    # x_ref: (TM, K) f32   w_ref: (K, N_pad) f32
    # b_ref: (1, N) f32    o_ref: (TM, N) f32     (N = num_options <= N_pad)
    n_out = o_ref.shape[-1]
    acc = jnp.dot(x_ref[...], w_ref[...], preferred_element_type=jnp.float32)
    o_ref[...] = acc[:, :n_out] + b_ref[...]


@functools.partial(jax.jit, static_argnames=("n_out",))
def pallas_linear(x, w_t_pad, b_row, *, n_out):
    """y = x @ w_t_pad[:, :n_out] + b_row; batch-tiled, ragged tail masked by Pallas."""
    B, K = x.shape
    K2, n_pad = w_t_pad.shape
    assert K == K2 and n_pad % LANE == 0 and n_out <= n_pad

    tm = _pick_tile_m(B)
    grid = (pl.cdiv(B, tm),)

    cost = pl.CostEstimate(
        flops=2 * B * K * n_pad,
        transcendentals=0,
        bytes_accessed=B * K * 4 + B * n_out * 4 + K * n_pad * 4,
    )

    return pl.pallas_call(
        _linear_kernel,
        out_shape=jax.ShapeDtypeStruct((B, n_out), jnp.float32),
        grid=grid,
        in_specs=[
            pl.BlockSpec((tm, K), lambda i: (i, 0)),      # streamed x tiles
            pl.BlockSpec((K, n_pad), lambda i: (0, 0)),   # resident weight
            pl.BlockSpec((1, n_out), lambda i: (0, 0)),   # resident bias
        ],
        out_specs=pl.BlockSpec((tm, n_out), lambda i: (i, 0)),
        compiler_params=pltpu.CompilerParams(
            # independent batch tiles -> shard across both v7x TensorCores
            dimension_semantics=("parallel",),
        ),
        cost_estimate=cost,
    )(x, w_t_pad, b_row)


# ---------------------------------------------------------------------------
# Deterministic parameter init (mirrors norm_col_init(W, std=1.0), bias=0).
# ---------------------------------------------------------------------------
def norm_col_init(key, shape, std=1.0):
    x = jax.random.normal(key, shape, dtype=jnp.float32)
    # scale each row so that sqrt(sum(x**2, axis=1)) == std (PyTorch dim=1),
    # with an eps guard against a (pathological) all-zero row.
    denom = jnp.sqrt(jnp.maximum(jnp.sum(x * x, axis=1, keepdims=True), 1e-12))
    return x * (std / denom)


class HOCModelPallas:
    """forward() (critic_linearO1) implemented as a Pallas TPU kernel.

    Only the parameters exercised by forward() are materialized.
    """

    def __init__(self, num_inputs, num_options, key):
        self.num_inputs = num_inputs
        self.num_options = num_options

        # critic_linearO1: weight (num_options, num_inputs), norm_col_init std=1.0
        self.w = norm_col_init(key, (num_options, num_inputs), std=1.0)
        self.b = jnp.zeros((num_options,), dtype=jnp.float32)

        # Cache the kernel-side parameters once (off the forward critical path):
        #  - W^T zero-padded to a 128-lane-wide MXU tile, kept in f32
        #  - bias as a (1, num_options) f32 row
        n_pad = _round_up(num_options, LANE)
        w_t = jnp.zeros((num_inputs, n_pad), dtype=jnp.float32)
        self.w_t_pad = w_t.at[:, :num_options].set(self.w.T)
        self.b_row = self.b.reshape(1, num_options)
        # TODO(synk): the remaining HOCModel heads (option1/2policy, termlayer1/2,
        # actionlayer, h2qo2) are not used by forward(); they could be fused into
        # the same lane-dense matmul if ever needed, but are not materialized here.

    def forward(self, inputs):
        # glue: flatten to (-1, num_inputs); stays f32 all the way through.
        x = inputs.reshape(-1, self.num_inputs)
        return pallas_linear(x, self.w_t_pad, self.b_row, n_out=self.num_options)


if __name__ == "__main__":
    key = jax.random.PRNGKey(0)
    k_w, k_x = jax.random.split(key)

    num_inputs = 32
    num_options = 4
    batch = 2

    model = HOCModelPallas(num_inputs, num_options, k_w)

    # inputs get .view(-1, num_inputs)'d inside forward — feed (batch, num_inputs)
    x = jax.random.normal(k_x, (batch, num_inputs), dtype=jnp.float32)

    out = model.forward(x)
    out = jax.block_until_ready(out)

    # Check against the true f32 reference (highest-precision host matmul).
    # Tolerance covers whichever MXU f32 decomposition Mosaic selects.
    ref = jnp.dot(x, model.w.T, precision=jax.lax.Precision.HIGHEST) + model.b

    assert out.shape == (batch, num_options)
    assert out.dtype == jnp.float32
    assert jnp.allclose(out, ref, atol=2e-2, rtol=2e-2)

    print("KERNEL_OK")
</pallas_src>

<mosaic_0001>
module attributes {stable_mosaic.version = 11 : i64} {
  func.func @_linear_kernel(%arg0: i32, %arg1: memref<8x32xf32, #tpu.memory_space<vmem>>, %arg2: memref<32x128xf32, #tpu.memory_space<vmem>>, %arg3: memref<1x4xf32, #tpu.memory_space<vmem>>, %arg4: memref<8x4xf32, #tpu.memory_space<vmem>>) attributes {dimension_semantics = [#tpu.dimension_semantics<parallel>], iteration_bounds = array<i64: 1>, scalar_prefetch = 0 : i64, scratch_operands = 0 : i64, tpu.core_type = #tpu.core_type<tc>, window_params = [{transform_indices = @transform_0, window_bounds = array<i64: 8, 32>}, {pipeline_mode = #tpu.pipeline_mode<synchronous>, transform_indices = @transform_1, window_bounds = array<i64: 32, 128>}, {pipeline_mode = #tpu.pipeline_mode<synchronous>, transform_indices = @transform_2, window_bounds = array<i64: 1, 4>}, {transform_indices = @transform_3, window_bounds = array<i64: 8, 4>}]} {
    %c0 = arith.constant 0 : index
    %c0_0 = arith.constant 0 : index
    %0 = vector.load %arg1[%c0, %c0_0] : memref<8x32xf32, #tpu.memory_space<vmem>>, vector<8x32xf32>
    %c0_1 = arith.constant 0 : index
    %c0_2 = arith.constant 0 : index
    %1 = vector.load %arg2[%c0_1, %c0_2] : memref<32x128xf32, #tpu.memory_space<vmem>>, vector<32x128xf32>
    %cst = arith.constant dense<0.000000e+00> : vector<8x128xf32>
    %2 = tpu.matmul %0, %1, %cst {dimension_numbers = #tpu.dot_dimension_numbers<[1], [0], [0], [1], [0, 0, 1, 1], [], []>} : vector<8x32xf32>, vector<32x128xf32>, vector<8x128xf32> -> vector<8x128xf32>
    %3 = vector.extract_strided_slice %2 {offsets = [0, 0], sizes = [8, 4], strides = [1, 1]} : vector<8x128xf32> to vector<8x4xf32>
    %c0_3 = arith.constant 0 : index
    %c0_4 = arith.constant 0 : index
    %4 = vector.load %arg3[%c0_3, %c0_4] : memref<1x4xf32, #tpu.memory_space<vmem>>, vector<1x4xf32>
    %5 = vector.broadcast %4 : vector<1x4xf32> to vector<8x4xf32>
    %6 = arith.addf %3, %5 : vector<8x4xf32>
    %c0_5 = arith.constant 0 : index
    %c0_6 = arith.constant 0 : index
    %7 = vector.load %arg4[%c0_5, %c0_6] : memref<8x4xf32, #tpu.memory_space<vmem>>, vector<8x4xf32>
    tpu.vector_store %arg4[%c0_5, %c0_6], %6 {strides = array<i32>} : memref<8x4xf32, #tpu.memory_space<vmem>>, vector<8x4xf32>,
    return
  }
  func.func @transform_0(%arg0: i32) -> (i32, i32) {
    %c0_i32 = arith.constant 0 : i32
    %c0_i32_0 = arith.constant 0 : i32
    return %arg0, %c0_i32 : i32, i32
  }
  func.func @transform_1(%arg0: i32) -> (i32, i32) {
    %c0_i32 = arith.constant 0 : i32
    %c0_i32_0 = arith.constant 0 : i32
    %c0_i32_1 = arith.constant 0 : i32
    return %c0_i32, %c0_i32_0 : i32, i32
  }
  func.func @transform_2(%arg0: i32) -> (i32, i32) {
    %c0_i32 = arith.constant 0 : i32
    %c0_i32_0 = arith.constant 0 : i32
    %c0_i32_1 = arith.constant 0 : i32
    return %c0_i32, %c0_i32_0 : i32, i32
  }
  func.func @transform_3(%arg0: i32) -> (i32, i32) {
    %c0_i32 = arith.constant 0 : i32
    %c0_i32_0 = arith.constant 0 : i32
    return %arg0, %c0_i32 : i32, i32
  }
}

</mosaic_0001>

<llo_original>
// kernel: pallas_linear.1
$region0: #{pallas_linear.1}
  #allocation0 [shape = 'u32[]', space=smem, size = 0x4, offset = 0x4, fixed_abs, tag = 'smem constant byte address 0x4 - core index']
  #allocation1 [shape = 'u32[144,128]{1,0:T(1,128)}', space=vmem, size = 0x12000, scoped, tag = 'internal scratch']
  %s0 = inlined_call_operand.hbm [shape: f32[2,32], index: 0, kind: input, shape index: {}]
  %s1 = inlined_call_operand.hbm [shape: f32[32,128], index: 1, kind: input, shape index: {}]
  %s2 = inlined_call_operand.vmem [shape: f32[1,4], index: 2, kind: input, shape index: {}]
  %s3 = inlined_call_operand.hbm [shape: f32[2,4], index: 3, kind: output, shape index: {}]
  %s4 = sld [smem:[#allocation0]]
  $region30: #{pallas_linear.1} parent=0
    _
  %s6 = ssub.s32 1, %s4
  %s7 = scalar_select 0, %s6, %s4
  $region1: #{pallas_linear.1} parent=0
    #allocation2 [shape = 'u8[4096]{0}', space=vmem, size = 0x1000, scoped, tag = 'input window, operand 0, single buffered']
    #allocation3 [shape = 's32[1]{0}', space=sflag, size = 0x4, scoped, tag = 'scoped memory for pallas_linear.1']
    #allocation4 [shape = 's32[1]{0}', space=sflag, size = 0x4, scoped, tag = 'scoped memory for pallas_linear.1']
    #allocation5 [shape = 'u8[16384]{0}', space=vmem, size = 0x4000, scoped, tag = 'input window, operand 1, single buffered']
    #allocation6 [shape = 's32[1]{0}', space=sflag, size = 0x4, scoped, tag = 'scoped memory for pallas_linear.1']
    #allocation7 [shape = 'u8[4096]{0}', space=vmem, size = 0x1000, scoped, tag = 'output window, operand 0, single buffered']
    %8 = vsyncpa [#allocation3], 0
    %9 = vsyncpa [#allocation6], 0
    %10 = vsyncpa [#allocation4], 0
    // Predicated region
    $region2: #{pallas_linear.1} parent=1 // pred_check
      _
    $region3: #{pallas_linear.1} parent=1 // pred_check_branch
      %12 = sbr.rel (0) target = $region5
    $region4: #{pallas_linear.1} parent=1 // pred_region
      %s14 = ssub.s32 128, 32
      %15 = vsyncadd [#allocation3], %s14
      %s16 = sshll.u32 [#allocation2], 4
      %s17 = int_to_ptr.vmem [resolvable:$true] %s16
      %22 = dma.hbm_to_vmem [thread:$0]  %s0, 32, %s17, [#allocation3], 32, 32, 2
    $region5: #{pallas_linear.1} parent=1 // pred_fallthru
      _
    // Predicated region
    $region6: #{pallas_linear.1} parent=1 // pred_check
      _
    $region7: #{pallas_linear.1} parent=1 // pred_check_branch
      %24 = sbr.rel (0) target = $region9
    $region8: #{pallas_linear.1} parent=1 // pred_region
      %s26 = ssub.s32 512, 512
      %27 = vsyncadd [#allocation6], %s26
      %s28 = sshll.u32 [#allocation5], 4
      %s29 = int_to_ptr.vmem [resolvable:$true] %s28
      %34 = dma.hbm_to_vmem [thread:$0]  %s1, 512, %s29, [#allocation6], 128, 128, 8
    $region9: #{pallas_linear.1} parent=1 // pred_fallthru
      _
    // Predicated region
    $region10: #{pallas_linear.1} parent=1 // pred_check
      _
    $region11: #{pallas_linear.1} parent=1 // pred_check_branch
      %36 = sbr.rel (0) target = $region13
    $region12: #{pallas_linear.1} parent=1 // pred_region
      _
    $region13: #{pallas_linear.1} parent=1 // pred_fallthru
      _
    // Predicated region
    $region14: #{pallas_linear.1} parent=1 // pred_check
      _
    $region15: #{pallas_linear.1} parent=1 // pred_check_branch
      %38 = sbr.rel (0) target = $region17
    $region16: #{pallas_linear.1} parent=1 // pred_region
      %39 = dma.done [#allocation3], 128
    $region17: #{pallas_linear.1} parent=1 // pred_fallthru
      _
    // Predicated region
    $region18: #{pallas_linear.1} parent=1 // pred_check
      _
    $region19: #{pallas_linear.1} parent=1 // pred_check_branch
      %41 = sbr.rel (0) target = $region21
    $region20: #{pallas_linear.1} parent=1 // pred_region
      %42 = dma.done [#allocation6], 512
    $region21: #{pallas_linear.1} parent=1 // pred_fallthru
      _
    %v43 = vld [vmem:[#allocation2] sm:$0xff]
    %v44 = vld [vmem:[#allocation5] sm:$0xff]
    %v45 = vld [vmem:[#allocation5 + $0x8] sm:$0xff]
    %v46 = vld [vmem:[#allocation5 + $0x10] sm:$0xff]
    %v47 = vld [vmem:[#allocation5 + $0x18] sm:$0xff]
    %vm48 = vcmask 261120
    %v50 = vsel %vm48, %v43, 0
    %52 = vmatprep.subr.mxu0 0.0
    %53 = vmatpush1.msra.mxu0 0.0
    %54 = vmatprep.subr.mxu0 0.0
    %55 = vmatpush1.msra.mxu0 0.0
    %56 = vmatprep.subr.mxu0 0.0
    %57 = vmatpush1.msra.mxu0 0.0
    %58 = vmatprep.subr.mxu0 0.0
    %59 = vmatpush1.msra.mxu0 0.0
    %60 = vmatprep.subr.mxu0 0.0
    %61 = vmatpush1.msra.mxu0 0.0
    %62 = vmatprep.subr.mxu0 0.0
    %63 = vmatpush1.msra.mxu0 0.0
    %64 = vmatprep.subr.mxu0 0.0
    %65 = vmatpush1.msra.mxu0 0.0
    %66 = vmatprep.subr.mxu0 0.0
    %67 = vmatpush1.msra.mxu0 0.0
    %68 = vmatprep.subr.mxu0 0.0
    %69 = vmatpush1.msra.mxu0 0.0
    %70 = vmatprep.subr.mxu0 0.0
    %71 = vmatpush1.msra.mxu0 0.0
    %72 = vmatprep.subr.mxu0 0.0
    %73 = vmatpush1.msra.mxu0 0.0
    %74 = vmatprep.subr.mxu0 0.0
    %75 = vmatpush1.msra.mxu0 0.0
    %76 = vmatprep.subr.mxu0 0.0
    %77 = vmatpush1.msra.mxu0 %v47
    %78 = vmatprep.subr.mxu0 0.0
    %79 = vmatpush1.msra.mxu0 %v46
    %80 = vmatprep.subr.mxu0 0.0
    %81 = vmatpush1.msra.mxu0 %v45
    %82 = vmatprep.subr.mxu0 0.0
    %83 = vmatpush1.msra.mxu0 %v44
    %84 = vmatprep.subr.mxu0 0.0
    %85 = vmatpush2.msra.mxu0 0.0
    %86 = vmatprep.subr.mxu0 0.0
    %87 = vmatpush2.msra.mxu0 0.0
    %88 = vmatprep.subr.mxu0 0.0
    %89 = vmatpush2.msra.mxu0 0.0
    %90 = vmatprep.subr.mxu0 0.0
    %91 = vmatpush2.msra.mxu0 0.0
    %92 = vmatprep.subr.mxu0 0.0
    %93 = vmatpush2.msra.mxu0 0.0
    %94 = vmatprep.subr.mxu0 0.0
    %95 = vmatpush2.msra.mxu0 0.0
    %96 = vmatprep.subr.mxu0 0.0
    %97 = vmatpush2.msra.mxu0 0.0
    %98 = vmatprep.subr.mxu0 0.0
    %99 = vmatpush2.msra.mxu0 0.0
    %100 = vmatprep.subr.mxu0 0.0
    %101 = vmatpush2.msra.mxu0 0.0
    %102 = vmatprep.subr.mxu0 0.0
    %103 = vmatpush2.msra.mxu0 0.0
    %104 = vmatprep.subr.mxu0 0.0
    %105 = vmatpush2.msra.mxu0 0.0
    %106 = vmatprep.subr.mxu0 0.0
    %107 = vmatpush2.msra.mxu0 0.0
    %108 = vmatprep.subr.mxu0 0.0
    %109 = vmatpush2.msra.mxu0 0.0
    %110 = vmatprep.subr.mxu0 0.0
    %111 = vmatpush2.msra.mxu0 0.0
    %112 = vmatprep.subr.mxu0 0.0
    %113 = vmatpush2.msra.mxu0 0.0
    %114 = vmatprep.subr.mxu0 0.0
    %115 = vmatpush2.msra.mxu0 0.0
    %116 = vmatprep.mubr.f32.mxu0 0.0
    %117 = vmatmul.mubr.f32.gmra.mxu0 %v50
    %v118 = vpop.f32.mrf.mxu0
    %v119 = vadd.f32 0.0, %v118
    %v120 = vpop.f32.mrf.mxu0
    %121 = vdwg.mxu0
    %v122 = vld [vmem:[%s2] sm:$0x1]
    %v124 = vlaneseq
    %v125 = vshrl.u32 %v124, 7
    %v126 = vsub.s32 0, %v125
    %v127 = vrot.slane %v122, %v126
    %v129 = vadd.f32 %v119, %v127
    %vm130 = vcmask 31744
    %131 = vst.msk [vmem:[#allocation7] sm:$0xff] %vm130, %v129
    // Predicated region
    $region22: #{pallas_linear.1} parent=1 // pred_check
      _
    $region23: #{pallas_linear.1} parent=1 // pred_check_branch
      %133 = sbr.rel (0) target = $region25
    $region24: #{pallas_linear.1} parent=1 // pred_region
      %s135 = ssub.s32 128, 32
      %136 = vsyncadd [#allocation4], %s135
      %s137 = sshll.u32 [#allocation7], 4
      %s138 = int_to_ptr.vmem [resolvable:$true] %s137
      %143 = dma.vmem_to_hbm [thread:$0]  %s138, 32, %s3, [#allocation4], 32, 32, 2
    $region25: #{pallas_linear.1} parent=1 // pred_fallthru
      _
    // Predicated region
    $region26: #{pallas_linear.1} parent=1 // pred_check
      _
    $region27: #{pallas_linear.1} parent=1 // pred_check_branch
      %145 = sbr.rel (0) target = $region29
    $region28: #{pallas_linear.1} parent=1 // pred_region
      %146 = dma.done [#allocation4], 128
    $region29: #{pallas_linear.1} parent=1 // pred_fallthru
      _
    %147 = vsyncpa [#allocation3], 1
    %148 = vsyncpa [#allocation6], 1
    %149 = vsyncpa [#allocation4], 1

</llo_original>
